<compile_context>
chip_gen: v7x
topology: tpu7x:2x2x1
jax: 0.10.0
libtpu: 0.0.40
codegen_flags: <defaults>
</compile_context>

<pallas_src>
import jax
import jax.numpy as jnp
from jax.experimental import pallas as pl
from jax.experimental.pallas import tpu as pltpu


def _round_up(v, m):
    return ((v + m - 1) // m) * m


# -----------------------------------------------------------------------------
# Kernels
# -----------------------------------------------------------------------------

def _outconv_vpu_kernel(x_ref, w_ref, b_ref, o_ref):
    """Small-channel path: unrolled VPU multiply-adds, scalar weights from SMEM.

    x_ref: (C_in, T) VMEM    w_ref: (C_out, C_in) SMEM f32
    b_ref: (C_out,)  SMEM f32    o_ref: (C_out, T) VMEM
    """
    c_out, c_in = w_ref.shape
    x = x_ref[...].astype(jnp.float32)                    # (C_in, T)
    for co in range(c_out):
        acc = x[0:1, :] * w_ref[co, 0]
        for ci in range(1, c_in):
            acc = acc + x[ci:ci + 1, :] * w_ref[co, ci]
        o_ref[co:co + 1, :] = (acc + b_ref[co]).astype(o_ref.dtype)


def _outconv_mxu_kernel(x_ref, w_ref, b_ref, o_ref):
    """Large-channel path: MXU matmul over channels.

    x_ref: (C_in, T) VMEM    w_ref: (C_out, C_in) VMEM
    b_ref: (C_out, 1) VMEM f32   o_ref: (C_out, T) VMEM
    """
    acc = jnp.dot(w_ref[...], x_ref[...], preferred_element_type=jnp.float32)
    o_ref[...] = (acc + b_ref[...]).astype(o_ref.dtype)


# -----------------------------------------------------------------------------
# Tiling
# -----------------------------------------------------------------------------

def _pick_spatial_tile(hw, n_batch, c_in, c_out, itemsize, *, reserved_bytes=0,
                       vmem_budget=24 << 20, max_tile=16384, min_grid_steps=8):
    """Largest multiple-of-128 spatial tile whose double-buffered x + out blocks
    fit the (sublane-padding-aware) VMEM budget, while keeping enough grid
    steps for pipelining / both v7x TensorCores."""
    pack = 8 * max(1, 4 // itemsize)          # sublanes per packed row: 8 f32, 16 bf16, 32 int8
    c_in_p = _round_up(c_in, pack)
    c_out_p = _round_up(c_out, pack)
    budget = max(vmem_budget - reserved_bytes, 2 << 20)
    per_col = 2 * (c_in_p + c_out_p) * itemsize   # double-buffered x + out per column
    t = budget // max(per_col, 1)
    t = max(128, (t // 128) * 128)
    t = min(t, max_tile)
    hw_128 = _round_up(hw, 128)
    t = min(t, hw_128)
    # Keep >= min_grid_steps so step-(i-1) writeback overlaps step-(i+1) prefetch
    # and both TensorCores (v7x) stay busy.
    while t > 128 and n_batch * pl.cdiv(hw, t) < min_grid_steps:
        t = max(128, ((t // 2) // 128) * 128)
    return t


# -----------------------------------------------------------------------------
# Wrapper
# -----------------------------------------------------------------------------

def outconv_forward(x_nchw, weight, bias, *, vpu_channel_limit=512):
    """1x1 Conv2d forward (PyTorch OutConv / nn.Conv2d(kernel_size=1) semantics).

    Args:
      x_nchw: (N, C_in, H, W)
      weight: (C_out, C_in, 1, 1)   (PyTorch Conv2d weight layout)
      bias:   (C_out,)
    Returns:
      (N, C_out, H, W), same dtype as x.
    """
    N, C_in, H, W = x_nchw.shape
    C_out = weight.shape[0]
    HW = H * W
    itemsize = jnp.dtype(x_nchw.dtype).itemsize
    pack = 8 * max(1, 4 // itemsize)

    use_vpu = (C_in * C_out) <= vpu_channel_limit

    # VMEM footprint of the grid-invariant weight/bias (MXU path only; the VPU
    # path keeps them in SMEM).
    if use_vpu:
        w_vmem_bytes = 0
        b_vmem_bytes = 0
    else:
        w_vmem_bytes = _round_up(C_out, pack) * _round_up(C_in, 128) * itemsize
        b_vmem_bytes = _round_up(C_out, pack) * 128 * 4
    single_buffer_w = (not use_vpu) and (w_vmem_bytes > (2 << 20))
    w_buffers = 1 if single_buffer_w else 2
    invariant_bytes = w_buffers * w_vmem_bytes + 2 * b_vmem_bytes

    t_hw = _pick_spatial_tile(HW, N, C_in, C_out, itemsize,
                              reserved_bytes=invariant_bytes)
    grid = (N, pl.cdiv(HW, t_hw))

    # Free, contiguous view: NCHW -> (N, C_in, H*W).  No pad, no transpose glue.
    x_3d = x_nchw.reshape(N, C_in, HW)

    x_spec = pl.BlockSpec((None, C_in, t_hw), lambda n, j: (n, 0, j))
    out_spec = pl.BlockSpec((None, C_out, t_hw), lambda n, j: (n, 0, j))

    if use_vpu:
        kernel = _outconv_vpu_kernel
        w_arg = weight.reshape(C_out, C_in).astype(jnp.float32)
        b_arg = bias.astype(jnp.float32)
        w_spec = pl.BlockSpec(memory_space=pltpu.MemorySpace.SMEM)
        b_spec = pl.BlockSpec(memory_space=pltpu.MemorySpace.SMEM)
    else:
        kernel = _outconv_mxu_kernel
        w_arg = weight.reshape(C_out, C_in)
        b_arg = bias.reshape(C_out, 1).astype(jnp.float32)
        if single_buffer_w:
            # Grid-invariant weight: no need to double-buffer a large matrix.
            w_spec = pl.BlockSpec((C_out, C_in), lambda n, j: (0, 0),
                                  pipeline_mode=pl.Buffered(1))
        else:
            w_spec = pl.BlockSpec((C_out, C_in), lambda n, j: (0, 0))
        b_spec = pl.BlockSpec((C_out, 1), lambda n, j: (0, 0))

    # VMEM actually needed: double-buffered x + out blocks, resident weights,
    # plus slack for compiler-internal scratch.  (Never a blanket 48 MiB — that
    # is 75% of v7x's 64 MiB physical VMEM.)
    c_in_p = _round_up(C_in, pack)
    c_out_p = _round_up(C_out, pack)
    x_blk = c_in_p * t_hw * itemsize
    o_blk = c_out_p * t_hw * itemsize
    vmem_need = 2 * (x_blk + o_blk) + invariant_bytes
    vmem_limit = int(max(vmem_need + (4 << 20), 16 << 20))

    cost = pl.CostEstimate(
        flops=2 * N * HW * C_in * C_out,
        transcendentals=0,
        bytes_accessed=(itemsize * N * HW * (C_in + C_out)
                        + 4 * (C_in * C_out + C_out)),
    )

    out_3d = pl.pallas_call(
        kernel,
        out_shape=jax.ShapeDtypeStruct((N, C_out, HW), x_nchw.dtype),
        grid_spec=pltpu.PrefetchScalarGridSpec(
            num_scalar_prefetch=0,
            grid=grid,
            in_specs=[x_spec, w_spec, b_spec],
            out_specs=out_spec,
        ),
        compiler_params=pltpu.CompilerParams(
            dimension_semantics=("parallel", "parallel"),
            vmem_limit_bytes=vmem_limit,
        ),
        cost_estimate=cost,
    )(x_3d, w_arg, b_arg)

    return out_3d.reshape(N, C_out, H, W)


if __name__ == "__main__":
    # Deterministic synthetic params & input (no checkpoint loading).
    N, C_in, C_out, H, W = 2, 4, 3, 16, 16

    key = jax.random.PRNGKey(0)
    kx, kw, kb = jax.random.split(key, 3)

    x = jax.random.normal(kx, (N, C_in, H, W), dtype=jnp.float32)
    # PyTorch Conv2d weight shape: (out_channels, in_channels, 1, 1)
    weight = jax.random.normal(kw, (C_out, C_in, 1, 1), dtype=jnp.float32) * 0.1
    bias = jax.random.normal(kb, (C_out,), dtype=jnp.float32) * 0.1

    out = jax.block_until_ready(outconv_forward(x, weight, bias))

    # Cross-check against a pure-JAX reference of the 1x1 conv.
    ref = (jnp.einsum("nchw,oc->nohw", x, weight.reshape(C_out, C_in))
           + bias.reshape(1, C_out, 1, 1))
    assert out.shape == (N, C_out, H, W)
    assert jnp.allclose(out, ref, atol=1e-5, rtol=1e-5)

    print("KERNEL_OK")
</pallas_src>

<mosaic_0001>
module attributes {stable_mosaic.version = 11 : i64} {
  func.func @_outconv_vpu_kernel(%arg0: i32, %arg1: i32, %arg2: memref<1x4x128xf32, #tpu.memory_space<vmem>>, %arg3: memref<3x4xf32, #tpu.memory_space<smem>>, %arg4: memref<3xf32, #tpu.memory_space<smem>>, %arg5: memref<1x3x128xf32, #tpu.memory_space<vmem>>) attributes {dimension_semantics = [#tpu.dimension_semantics<parallel>, #tpu.dimension_semantics<parallel>], iteration_bounds = array<i64: 2, 2>, scalar_prefetch = 0 : i64, scratch_operands = 0 : i64, tpu.core_type = #tpu.core_type<tc>, window_params = [{transform_indices = @transform_0, window_bounds = array<i64: 1, 4, 128>}, {transform_indices = @transform_1, window_bounds = array<i64: 3, 4>}, {transform_indices = @transform_2, window_bounds = array<i64: 3>}, {transform_indices = @transform_3, window_bounds = array<i64: 1, 3, 128>}]} {
    %c0 = arith.constant 0 : index
    %c0_0 = arith.constant 0 : index
    %c0_1 = arith.constant 0 : index
    %0 = vector.load %arg2[%c0, %c0_0, %c0_1] : memref<1x4x128xf32, #tpu.memory_space<vmem>>, vector<1x4x128xf32>
    %1 = vector.shape_cast %0 : vector<1x4x128xf32> to vector<4x128xf32>
    %2 = vector.extract_strided_slice %1 {offsets = [0, 0], sizes = [1, 128], strides = [1, 1]} : vector<4x128xf32> to vector<1x128xf32>
    %c0_2 = arith.constant 0 : index
    %c0_3 = arith.constant 0 : index
    %3 = memref.load %arg3[%c0_2, %c0_3] : memref<3x4xf32, #tpu.memory_space<smem>>
    %4 = vector.broadcast %3 : f32 to vector<1x128xf32>
    %5 = arith.mulf %2, %4 : vector<1x128xf32>
    %6 = vector.extract_strided_slice %1 {offsets = [1, 0], sizes = [1, 128], strides = [1, 1]} : vector<4x128xf32> to vector<1x128xf32>
    %c0_4 = arith.constant 0 : index
    %c1 = arith.constant 1 : index
    %7 = memref.load %arg3[%c0_4, %c1] : memref<3x4xf32, #tpu.memory_space<smem>>
    %8 = vector.broadcast %7 : f32 to vector<1x128xf32>
    %9 = arith.mulf %6, %8 : vector<1x128xf32>
    %10 = arith.addf %5, %9 : vector<1x128xf32>
    %11 = vector.extract_strided_slice %1 {offsets = [2, 0], sizes = [1, 128], strides = [1, 1]} : vector<4x128xf32> to vector<1x128xf32>
    %c0_5 = arith.constant 0 : index
    %c2 = arith.constant 2 : index
    %12 = memref.load %arg3[%c0_5, %c2] : memref<3x4xf32, #tpu.memory_space<smem>>
    %13 = vector.broadcast %12 : f32 to vector<1x128xf32>
    %14 = arith.mulf %11, %13 : vector<1x128xf32>
    %15 = arith.addf %10, %14 : vector<1x128xf32>
    %16 = vector.extract_strided_slice %1 {offsets = [3, 0], sizes = [1, 128], strides = [1, 1]} : vector<4x128xf32> to vector<1x128xf32>
    %c0_6 = arith.constant 0 : index
    %c3 = arith.constant 3 : index
    %17 = memref.load %arg3[%c0_6, %c3] : memref<3x4xf32, #tpu.memory_space<smem>>
    %18 = vector.broadcast %17 : f32 to vector<1x128xf32>
    %19 = arith.mulf %16, %18 : vector<1x128xf32>
    %20 = arith.addf %15, %19 : vector<1x128xf32>
    %c0_7 = arith.constant 0 : index
    %21 = memref.load %arg4[%c0_7] : memref<3xf32, #tpu.memory_space<smem>>
    %22 = vector.broadcast %21 : f32 to vector<1x128xf32>
    %23 = arith.addf %20, %22 : vector<1x128xf32>
    %c0_8 = arith.constant 0 : index
    %c0_9 = arith.constant 0 : index
    %c0_10 = arith.constant 0 : index
    %24 = vector.load %arg5[%c0_8, %c0_9, %c0_10] : memref<1x3x128xf32, #tpu.memory_space<vmem>>, vector<1x1x128xf32>
    %25 = vector.shape_cast %24 : vector<1x1x128xf32> to vector<1x128xf32>
    %26 = vector.shape_cast %23 : vector<1x128xf32> to vector<1x1x128xf32>
    tpu.vector_store %arg5[%c0_8, %c0_9, %c0_10], %26 {strides = array<i32>} : memref<1x3x128xf32, #tpu.memory_space<vmem>>, vector<1x1x128xf32>,
    %27 = vector.extract_strided_slice %1 {offsets = [0, 0], sizes = [1, 128], strides = [1, 1]} : vector<4x128xf32> to vector<1x128xf32>
    %c1_11 = arith.constant 1 : index
    %c0_12 = arith.constant 0 : index
    %28 = memref.load %arg3[%c1_11, %c0_12] : memref<3x4xf32, #tpu.memory_space<smem>>
    %29 = vector.broadcast %28 : f32 to vector<1x128xf32>
    %30 = arith.mulf %27, %29 : vector<1x128xf32>
    %31 = vector.extract_strided_slice %1 {offsets = [1, 0], sizes = [1, 128], strides = [1, 1]} : vector<4x128xf32> to vector<1x128xf32>
    %c1_13 = arith.constant 1 : index
    %c1_14 = arith.constant 1 : index
    %32 = memref.load %arg3[%c1_13, %c1_14] : memref<3x4xf32, #tpu.memory_space<smem>>
    %33 = vector.broadcast %32 : f32 to vector<1x128xf32>
    %34 = arith.mulf %31, %33 : vector<1x128xf32>
    %35 = arith.addf %30, %34 : vector<1x128xf32>
    %36 = vector.extract_strided_slice %1 {offsets = [2, 0], sizes = [1, 128], strides = [1, 1]} : vector<4x128xf32> to vector<1x128xf32>
    %c1_15 = arith.constant 1 : index
    %c2_16 = arith.constant 2 : index
    %37 = memref.load %arg3[%c1_15, %c2_16] : memref<3x4xf32, #tpu.memory_space<smem>>
    %38 = vector.broadcast %37 : f32 to vector<1x128xf32>
    %39 = arith.mulf %36, %38 : vector<1x128xf32>
    %40 = arith.addf %35, %39 : vector<1x128xf32>
    %41 = vector.extract_strided_slice %1 {offsets = [3, 0], sizes = [1, 128], strides = [1, 1]} : vector<4x128xf32> to vector<1x128xf32>
    %c1_17 = arith.constant 1 : index
    %c3_18 = arith.constant 3 : index
    %42 = memref.load %arg3[%c1_17, %c3_18] : memref<3x4xf32, #tpu.memory_space<smem>>
    %43 = vector.broadcast %42 : f32 to vector<1x128xf32>
    %44 = arith.mulf %41, %43 : vector<1x128xf32>
    %45 = arith.addf %40, %44 : vector<1x128xf32>
    %c1_19 = arith.constant 1 : index
    %46 = memref.load %arg4[%c1_19] : memref<3xf32, #tpu.memory_space<smem>>
    %47 = vector.broadcast %46 : f32 to vector<1x128xf32>
    %48 = arith.addf %45, %47 : vector<1x128xf32>
    %c0_20 = arith.constant 0 : index
    %c1_21 = arith.constant 1 : index
    %c0_22 = arith.constant 0 : index
    %49 = vector.load %arg5[%c0_20, %c1_21, %c0_22] : memref<1x3x128xf32, #tpu.memory_space<vmem>>, vector<1x1x128xf32>
    %50 = vector.shape_cast %49 : vector<1x1x128xf32> to vector<1x128xf32>
    %51 = vector.shape_cast %48 : vector<1x128xf32> to vector<1x1x128xf32>
    tpu.vector_store %arg5[%c0_20, %c1_21, %c0_22], %51 {strides = array<i32>} : memref<1x3x128xf32, #tpu.memory_space<vmem>>, vector<1x1x128xf32>,
    %52 = vector.extract_strided_slice %1 {offsets = [0, 0], sizes = [1, 128], strides = [1, 1]} : vector<4x128xf32> to vector<1x128xf32>
    %c2_23 = arith.constant 2 : index
    %c0_24 = arith.constant 0 : index
    %53 = memref.load %arg3[%c2_23, %c0_24] : memref<3x4xf32, #tpu.memory_space<smem>>
    %54 = vector.broadcast %53 : f32 to vector<1x128xf32>
    %55 = arith.mulf %52, %54 : vector<1x128xf32>
    %56 = vector.extract_strided_slice %1 {offsets = [1, 0], sizes = [1, 128], strides = [1, 1]} : vector<4x128xf32> to vector<1x128xf32>
    %c2_25 = arith.constant 2 : index
    %c1_26 = arith.constant 1 : index
    %57 = memref.load %arg3[%c2_25, %c1_26] : memref<3x4xf32, #tpu.memory_space<smem>>
    %58 = vector.broadcast %57 : f32 to vector<1x128xf32>
    %59 = arith.mulf %56, %58 : vector<1x128xf32>
    %60 = arith.addf %55, %59 : vector<1x128xf32>
    %61 = vector.extract_strided_slice %1 {offsets = [2, 0], sizes = [1, 128], strides = [1, 1]} : vector<4x128xf32> to vector<1x128xf32>
    %c2_27 = arith.constant 2 : index
    %c2_28 = arith.constant 2 : index
    %62 = memref.load %arg3[%c2_27, %c2_28] : memref<3x4xf32, #tpu.memory_space<smem>>
    %63 = vector.broadcast %62 : f32 to vector<1x128xf32>
    %64 = arith.mulf %61, %63 : vector<1x128xf32>
    %65 = arith.addf %60, %64 : vector<1x128xf32>
    %66 = vector.extract_strided_slice %1 {offsets = [3, 0], sizes = [1, 128], strides = [1, 1]} : vector<4x128xf32> to vector<1x128xf32>
    %c2_29 = arith.constant 2 : index
    %c3_30 = arith.constant 3 : index
    %67 = memref.load %arg3[%c2_29, %c3_30] : memref<3x4xf32, #tpu.memory_space<smem>>
    %68 = vector.broadcast %67 : f32 to vector<1x128xf32>
    %69 = arith.mulf %66, %68 : vector<1x128xf32>
    %70 = arith.addf %65, %69 : vector<1x128xf32>
    %c2_31 = arith.constant 2 : index
    %71 = memref.load %arg4[%c2_31] : memref<3xf32, #tpu.memory_space<smem>>
    %72 = vector.broadcast %71 : f32 to vector<1x128xf32>
    %73 = arith.addf %70, %72 : vector<1x128xf32>
    %c0_32 = arith.constant 0 : index
    %c2_33 = arith.constant 2 : index
    %c0_34 = arith.constant 0 : index
    %74 = vector.load %arg5[%c0_32, %c2_33, %c0_34] : memref<1x3x128xf32, #tpu.memory_space<vmem>>, vector<1x1x128xf32>
    %75 = vector.shape_cast %74 : vector<1x1x128xf32> to vector<1x128xf32>
    %76 = vector.shape_cast %73 : vector<1x128xf32> to vector<1x1x128xf32>
    tpu.vector_store %arg5[%c0_32, %c2_33, %c0_34], %76 {strides = array<i32>} : memref<1x3x128xf32, #tpu.memory_space<vmem>>, vector<1x1x128xf32>,
    return
  }
  func.func @transform_0(%arg0: i32, %arg1: i32) -> (i32, i32, i32) {
    %c0_i32 = arith.constant 0 : i32
    %c0_i32_0 = arith.constant 0 : i32
    return %arg0, %c0_i32, %arg1 : i32, i32, i32
  }
  func.func @transform_1(%arg0: i32, %arg1: i32) -> (i32, i32) {
    %c0_i32 = arith.constant 0 : i32
    %c0_i32_0 = arith.constant 0 : i32
    %c0_i32_1 = arith.constant 0 : i32
    return %c0_i32, %c0_i32_0 : i32, i32
  }
  func.func @transform_2(%arg0: i32, %arg1: i32) -> i32 {
    %c0_i32 = arith.constant 0 : i32
    %c0_i32_0 = arith.constant 0 : i32
    return %c0_i32 : i32
  }
  func.func @transform_3(%arg0: i32, %arg1: i32) -> (i32, i32, i32) {
    %c0_i32 = arith.constant 0 : i32
    %c0_i32_0 = arith.constant 0 : i32
    return %arg0, %c0_i32, %arg1 : i32, i32, i32
  }
}

</mosaic_0001>

<llo_original>
// kernel: tpu_custom_call.1
$region0: #{tpu_custom_call.1}
  #allocation0 [shape = 'u32[]', space=smem, size = 0x4, offset = 0x4, fixed_abs, tag = 'smem constant byte address 0x4 - core index']
  #allocation1 [shape = 'u32[144,128]{1,0:T(1,128)}', space=vmem, size = 0x12000, scoped, tag = 'internal scratch']
  %s0 = inlined_call_operand.hbm [shape: f32[2,4,256], index: 0, kind: input, shape index: {}]
  %s1 = inlined_call_operand.hbm [shape: f32[3,4], index: 1, kind: input, shape index: {}]
  %s2 = inlined_call_operand.vmem [shape: f32[3], index: 2, kind: input, shape index: {}]
  %s3 = inlined_call_operand.vmem [shape: f32[2,3,256], index: 3, kind: output, shape index: {}]
  %s4 = sld [smem:[#allocation0]]
  $region57: #{tpu_custom_call.1} parent=0
    _
  %s6 = ssub.s32 1, %s4
  %s7 = scalar_select 0, %s6, %s4
  $region1: #{tpu_custom_call.1} parent=0
    #allocation2 [shape = 'u8[4096]{0}', space=vmem, size = 0x1000, scoped, tag = 'input window, operand 0']
    #allocation3 [shape = 's32[2]{0}', space=sflag, size = 0x8, scoped, tag = 'scoped memory for tpu_custom_call.1']
    #allocation4 [shape = 's32[2]{0}', space=sflag, size = 0x8, scoped, tag = 'scoped memory for tpu_custom_call.1']
    #allocation5 [shape = 's32[2]{0}', space=sflag, size = 0x8, scoped, tag = 'scoped memory for tpu_custom_call.1']
    #allocation6 [shape = 'u8[2048]{0}', space=smem, size = 0x800, scoped, tag = 'input window, operand 1, single buffered']
    #allocation7 [shape = 'u8[512]{0}', space=smem, size = 0x200, scoped, tag = 'input window, operand 2, single buffered']
    %8 = vsyncpa [#allocation3], 0
    %s9 = scalar_lea.sflag [#allocation3], 1
    %10 = vsyncpa %s9, 0
    %11 = vsyncpa [#allocation4], 0
    %12 = vsyncpa [#allocation5], 0
    loop: start=0, step=1, limit=6
    $region2: #{tpu_custom_call.1} parent=1 // loop_pre_header
      _
    $region3: #{tpu_custom_call.1} parent=1 // loop_header
      %s14 = sphi 0, %s18
      %p15 = scmp.ge.s32.totalorder %s14, 6
      %s21 = sphi 0, %s33
      %s22 = sphi 0, %s29
      %s23 = sphi 0, %s21
      %s24 = sphi 0, %s22
      %s25 = sphi 0, %s23
      %s26 = sphi 0, %s24
      %s38 = sphi 0, %s40
      %s41 = sphi 0, %s38
      %s42 = sphi 0, %s41
      %s58 = sphi 0, %s42
      %s62 = sphi 0, %s62
      %s64 = sphi 0, %s62
      %s65 = sphi 0, %s64
      %s79 = sphi 0, %s65
      %s83 = sphi 0, %s83
      %s85 = sphi 0, %s83
      %s86 = sphi 0, %s85
      %s100 = sphi 0, %s86
      %s108 = sphi 0, %s110
      %s111 = sphi 0, %s108
      %s112 = sphi 0, %s111
      %s128 = sphi 0, %s112
    $region4: #{tpu_custom_call.1} parent=1 // loop_header_branch
      %17 = sbr.rel (%p15) target = $region8
    $region5: #{tpu_custom_call.1} parent=1 // loop_body
      %s19 = ssub.s32 %s14, 1
      %s20 = ssub.s32 %s14, 2
      %s27 = sadd.s32 1, %s22
      %p28 = scmp.ge.s32.totalorder %s27, 2
      %s29 = scalar_select %p28, 0, %s27
      %s30 = sadd.s32 1, %s21
      %s31 = scalar_select %p28, %s30, %s21
      %p32 = scmp.ge.s32.totalorder %s31, 2
      %s33 = scalar_select %p32, 0, %s31
      %s34 = ssub.s32 %s21, %s33
      %s35 = ssub.s32 %s22, %s29
      %s36 = sor.u32 %s34, %s35
      %p37 = scmp.eq.s32.totalorder %s36, 0
      %s39 = sadd.s32 %s38, 1
      %s40 = scalar_select %p37, %s38, %s39
      %p43 = pneg %p37
      %p44 = scmp.eq.s32.totalorder %s14, 3
      %p45 = por %p43, %p44
      %p46 = scmp.ne.s32.totalorder %s38, %s41
      %p47 = scmp.eq.s32.totalorder %s14, 0
      %p48 = por %p46, %p47
      %p49 = scmp.ne.s32.totalorder %s38, %s41
      %p50 = scmp.eq.s32.totalorder %s19, 3
      %p51 = por %p49, %p50
      %p52 = scmp.ne.s32.totalorder %s41, %s42
      %p53 = scmp.eq.s32.totalorder %s19, 0
      %p54 = por %p52, %p53
      %p55 = scmp.ne.s32.totalorder %s41, %s42
      %p56 = scmp.eq.s32.totalorder %s20, 3
      %p57 = por %p55, %p56
      %p59 = scmp.ne.s32.totalorder %s42, %s58
      %p60 = scmp.eq.s32.totalorder %s20, 0
      %p61 = por %p59, %p60
      %s63 = sadd.s32 %s62, 1
      %p66 = scmp.eq.s32.totalorder %s14, 3
      %p67 = scmp.ne.s32.totalorder %s62, %s64
      %p68 = scmp.eq.s32.totalorder %s14, 0
      %p69 = por %p67, %p68
      %p70 = scmp.ne.s32.totalorder %s62, %s64
      %p71 = scmp.eq.s32.totalorder %s19, 3
      %p72 = por %p70, %p71
      %p73 = scmp.ne.s32.totalorder %s64, %s65
      %p74 = scmp.eq.s32.totalorder %s19, 0
      %p75 = por %p73, %p74
      %p76 = scmp.ne.s32.totalorder %s64, %s65
      %p77 = scmp.eq.s32.totalorder %s20, 3
      %p78 = por %p76, %p77
      %p80 = scmp.ne.s32.totalorder %s65, %s79
      %p81 = scmp.eq.s32.totalorder %s20, 0
      %p82 = por %p80, %p81
      %s84 = sadd.s32 %s83, 1
      %p87 = scmp.eq.s32.totalorder %s14, 3
      %p88 = scmp.ne.s32.totalorder %s83, %s85
      %p89 = scmp.eq.s32.totalorder %s14, 0
      %p90 = por %p88, %p89
      %p91 = scmp.ne.s32.totalorder %s83, %s85
      %p92 = scmp.eq.s32.totalorder %s19, 3
      %p93 = por %p91, %p92
      %p94 = scmp.ne.s32.totalorder %s85, %s86
      %p95 = scmp.eq.s32.totalorder %s19, 0
      %p96 = por %p94, %p95
      %p97 = scmp.ne.s32.totalorder %s85, %s86
      %p98 = scmp.eq.s32.totalorder %s20, 3
      %p99 = por %p97, %p98
      %p101 = scmp.ne.s32.totalorder %s86, %s100
      %p102 = scmp.eq.s32.totalorder %s20, 0
      %p103 = por %p101, %p102
      %s104 = ssub.s32 %s21, %s33
      %s105 = ssub.s32 %s22, %s29
      %s106 = sor.u32 %s104, %s105
      %p107 = scmp.eq.s32.totalorder %s106, 0
      %s109 = sadd.s32 %s108, 1
      %s110 = scalar_select %p107, %s108, %s109
      %p113 = pneg %p107
      %p114 = scmp.eq.s32.totalorder %s14, 3
      %p115 = por %p113, %p114
      %p116 = scmp.ne.s32.totalorder %s108, %s111
      %p117 = scmp.eq.s32.totalorder %s14, 0
      %p118 = por %p116, %p117
      %p119 = scmp.ne.s32.totalorder %s108, %s111
      %p120 = scmp.eq.s32.totalorder %s19, 3
      %p121 = por %p119, %p120
      %p122 = scmp.ne.s32.totalorder %s111, %s112
      %p123 = scmp.eq.s32.totalorder %s19, 0
      %p124 = por %p122, %p123
      %p125 = scmp.ne.s32.totalorder %s111, %s112
      %p126 = scmp.eq.s32.totalorder %s20, 3
      %p127 = por %p125, %p126
      %p129 = scmp.ne.s32.totalorder %s112, %s128
      %p130 = scmp.eq.s32.totalorder %s20, 0
      %p131 = por %p129, %p130
      %p132 = scmp.le.s32.totalorder 1, %s14
      %p133 = scmp.lt.s32.totalorder %s14, 5
      %p134 = pnand %p132, %p133
      %p135 = pneg %p134
      // Predicated region
      $region9: #{tpu_custom_call.1} parent=5 // pred_check
        _
      $region10: #{tpu_custom_call.1} parent=5 // pred_check_branch
        %137 = sbr.rel (%p134) target = $region12
      $region11: #{tpu_custom_call.1} parent=5 // pred_region
        %s138 = ssub.s32 %s14, 1
        // Predicated region
        $region13: #{tpu_custom_call.1} parent=11 // pred_check
          %p139 = pneg %p75
        $region14: #{tpu_custom_call.1} parent=11 // pred_check_branch
          %141 = sbr.rel (%p139) target = $region16
        $region15: #{tpu_custom_call.1} parent=11 // pred_region
          %s143 = ssub.s32 64, 64
          %144 = vsyncadd [#allocation4], %s143
          %147 = dma.hbm_to_smem %s1, 64, [#allocation6], [#allocation4]
        $region16: #{tpu_custom_call.1} parent=11 // pred_fallthru
          _
        // Predicated region
        $region17: #{tpu_custom_call.1} parent=11 // pred_check
          %p148 = pneg %p96
        $region18: #{tpu_custom_call.1} parent=11 // pred_check_branch
          %150 = sbr.rel (%p148) target = $region20
        $region19: #{tpu_custom_call.1} parent=11 // pred_region
          %s152 = ssub.s32 16, 16
          %153 = vsyncadd [#allocation5], %s152
          %s155 = sshll.u32 %s2, 4
          %s156 = int_to_ptr.vmem [resolvable:$true] %s155
          %158 = dma.vmem_to_smem %s156, 16, [#allocation7], [#allocation5]
        $region20: #{tpu_custom_call.1} parent=11 // pred_fallthru
          _
      $region12: #{tpu_custom_call.1} parent=5 // pred_fallthru
        _
      %p159 = scmp.lt.s32.totalorder %s14, 4
      // Predicated region
      $region21: #{tpu_custom_call.1} parent=5 // pred_check
        %p160 = pneg %p159
      $region22: #{tpu_custom_call.1} parent=5 // pred_check_branch
        %162 = sbr.rel (%p160) target = $region24
      $region23: #{tpu_custom_call.1} parent=5 // pred_region
        // Predicated region
        $region25: #{tpu_custom_call.1} parent=23 // pred_check
          %p163 = pneg %p48
        $region26: #{tpu_custom_call.1} parent=23 // pred_check_branch
          %165 = sbr.rel (%p163) target = $region28
        $region27: #{tpu_custom_call.1} parent=23 // pred_region
          %s166 = sand.u32 %s38, 1
          %s167 = scalar_lea.sflag [#allocation3], %s166
          %s168 = sand.u32 %s38, 1
          %s169 = smul.addr %s168, 4
          %s170 = scalar_lea.vmem [#allocation2], %s169
          %s172 = ssub.s32 64, 64
          %173 = vsyncadd %s167, %s172
          %s174 = smul.addr %s21, 2
          %s175 = sadd.s32 %s22, %s174
          %s176 = smul.addr %s175, 64
          %s177 = scalar_lea.hbm %s0, %s176
          %s179 = sshll.u32 %s170, 4
          %s180 = int_to_ptr.vmem [resolvable:$true] %s179
          %182 = dma.hbm_to_vmem [thread:$0]  %s177, 64, %s180, %s167
        $region28: #{tpu_custom_call.1} parent=23 // pred_fallthru
          _
      $region24: #{tpu_custom_call.1} parent=5 // pred_fallthru
        _
      %p183 = scmp.le.s32.totalorder 1, %s14
      %p184 = scmp.lt.s32.totalorder %s14, 5
      %p185 = pnand %p183, %p184
      %p186 = pneg %p185
      // Predicated region
      $region29: #{tpu_custom_call.1} parent=5 // pred_check
        _
      $region30: #{tpu_custom_call.1} parent=5 // pred_check_branch
        %188 = sbr.rel (%p185) target = $region32
      $region31: #{tpu_custom_call.1} parent=5 // pred_region
        %s189 = ssub.s32 %s14, 1
        %s190 = sand.u32 %s41, 1
        %s191 = scalar_lea.sflag [#allocation3], %s190
        %s192 = sand.u32 %s41, 1
        %s193 = smul.addr %s192, 4
        %s194 = scalar_lea.vmem [#allocation2], %s193
        // Predicated region
        $region33: #{tpu_custom_call.1} parent=31 // pred_check
          %p195 = pneg %p54
        $region34: #{tpu_custom_call.1} parent=31 // pred_check_branch
          %197 = sbr.rel (%p195) target = $region36
        $region35: #{tpu_custom_call.1} parent=31 // pred_region
          %198 = dma.done %s191, 64
        $region36: #{tpu_custom_call.1} parent=31 // pred_fallthru
          _
        // Predicated region
        $region37: #{tpu_custom_call.1} parent=31 // pred_check
          %p199 = pneg %p75
        $region38: #{tpu_custom_call.1} parent=31 // pred_check_branch
          %201 = sbr.rel (%p199) target = $region40
        $region39: #{tpu_custom_call.1} parent=31 // pred_region
          %202 = dma.done [#allocation4], 64
        $region40: #{tpu_custom_call.1} parent=31 // pred_fallthru
          _
        // Predicated region
        $region41: #{tpu_custom_call.1} parent=31 // pred_check
          %p203 = pneg %p96
        $region42: #{tpu_custom_call.1} parent=31 // pred_check_branch
          %205 = sbr.rel (%p203) target = $region44
        $region43: #{tpu_custom_call.1} parent=31 // pred_region
          %206 = dma.done [#allocation5], 16
        $region44: #{tpu_custom_call.1} parent=31 // pred_fallthru
          _
        %207 = sfence
        %s208 = sand.u32 %s41, 1
        %s209 = scalar_lea.sflag [#allocation3], %s208
        %s210 = sand.u32 %s41, 1
        %s211 = smul.addr %s210, 4
        %s212 = scalar_lea.vmem [#allocation2], %s211
        %p213 = pneg %p54
        %p214 = pneg %p51
        %p215 = pneg %p75
        %p216 = pneg %p72
        %p217 = pneg %p96
        %p218 = pneg %p93
        %p219 = pneg %p124
        %p220 = pneg %p121
        %p221 = scmp.lt.s32.totalorder %s23, 1
        %s222 = scalar_select %p221, %s23, 1
        %p223 = scmp.lt.s32.totalorder %s24, 1
        %s224 = scalar_select %p223, %s24, 1
        %s225 = smul.addr %s222, 2
        %s226 = sadd.s32 %s224, %s225
        %s227 = smul.addr %s226, 4
        %s228 = scalar_lea.vmem %s3, %s227
        %p229 = scmp.lt.s32.totalorder %s23, 1
        %s230 = scalar_select %p229, %s23, 1
        %p231 = scmp.lt.s32.totalorder %s24, 1
        %s232 = scalar_select %p231, %s24, 1
        %s233 = smul.addr %s230, 2
        %s234 = sadd.s32 %s232, %s233
        %s235 = smul.addr %s234, 4
        %s236 = scalar_lea.vmem %s3, %s235
        %v237 = vld [vmem:[%s194] sm:$0xf]
        %s238 = sld [smem:[#allocation6]]
        %v239 = vstv %s238
        %v240 = vmul.f32 %v237, %v239
        %s241 = sld [smem:[#allocation6 + $0x1]]
        %v242 = vstv %s241
        %v243 = vmul.f32 %v237, %v242
        %v245 = vrot.slane %v243, 1
        %v247 = vadd.f32 %v240, %v245
        %s248 = sld [smem:[#allocation6 + $0x2]]
        %v249 = vstv %s248
        %v250 = vmul.f32 %v237, %v249
        %v252 = vrot.slane %v250, 2
        %v254 = vadd.f32 %v247, %v252
        %s255 = sld [smem:[#allocation6 + $0x3]]
        %v256 = vstv %s255
        %v257 = vmul.f32 %v237, %v256
        %v259 = vrot.slane %v257, 3
        %v261 = vadd.f32 %v254, %v259
        %s262 = sld [smem:[#allocation7]]
        %v263 = vstv %s262
        %v264 = vadd.f32 %v261, %v263
        %265 = vst [vmem:[%s236] sm:$0x1] %v264
        %s266 = sld [smem:[#allocation6 + $0x80]]
        %v267 = vstv %s266
        %v268 = vmul.f32 %v237, %v267
        %s269 = sld [smem:[#allocation6 + $0x81]]
        %v270 = vstv %s269
        %v271 = vmul.f32 %v237, %v270
        %v273 = vrot.slane %v271, 1
        %v275 = vadd.f32 %v268, %v273
        %s276 = sld [smem:[#allocation6 + $0x82]]
        %v277 = vstv %s276
        %v278 = vmul.f32 %v237, %v277
        %v280 = vrot.slane %v278, 2
        %v282 = vadd.f32 %v275, %v280
        %s283 = sld [smem:[#allocation6 + $0x83]]
        %v284 = vstv %s283
        %v285 = vmul.f32 %v237, %v284
        %v287 = vrot.slane %v285, 3
        %v289 = vadd.f32 %v282, %v287
        %s290 = sld [smem:[#allocation7 + $0x1]]
        %v291 = vstv %s290
        %v292 = vadd.f32 %v289, %v291
        %293 = vst [vmem:[%s236 + $0x1] sm:$0x1] %v292
        %s294 = sld [smem:[#allocation6 + $0x100]]
        %v295 = vstv %s294
        %v296 = vmul.f32 %v237, %v295
        %s297 = sld [smem:[#allocation6 + $0x101]]
        %v298 = vstv %s297
        %v299 = vmul.f32 %v237, %v298
        %v301 = vrot.slane %v299, 1
        %v303 = vadd.f32 %v296, %v301
        %s304 = sld [smem:[#allocation6 + $0x102]]
        %v305 = vstv %s304
        %v306 = vmul.f32 %v237, %v305
        %v308 = vrot.slane %v306, 2
        %v310 = vadd.f32 %v303, %v308
        %s311 = sld [smem:[#allocation6 + $0x103]]
        %v312 = vstv %s311
        %v313 = vmul.f32 %v237, %v312
        %v315 = vrot.slane %v313, 3
        %v317 = vadd.f32 %v310, %v315
        %s318 = sld [smem:[#allocation7 + $0x2]]
        %v319 = vstv %s318
        %v320 = vadd.f32 %v317, %v319
        %321 = vst [vmem:[%s236 + $0x2] sm:$0x1] %v320
        %p322 = scmp.lt.s32.totalorder %s23, 1
        %s323 = scalar_select %p322, %s23, 1
        %p324 = scmp.lt.s32.totalorder %s24, 1
        %s325 = scalar_select %p324, %s24, 1
        %s326 = smul.addr %s323, 2
        %s327 = sadd.s32 %s325, %s326
        %s328 = smul.addr %s327, 4
        %s329 = scalar_lea.vmem %s3, %s328
        // Predicated region
        $region45: #{tpu_custom_call.1} parent=31 // pred_check
          %p330 = pneg %p121
        $region46: #{tpu_custom_call.1} parent=31 // pred_check_branch
          %332 = sbr.rel (%p330) target = $region48
        $region47: #{tpu_custom_call.1} parent=31 // pred_region
          _
        $region48: #{tpu_custom_call.1} parent=31 // pred_fallthru
          _
      $region32: #{tpu_custom_call.1} parent=5 // pred_fallthru
        _
      %p333 = scmp.le.s32.totalorder 2, %s14
      // Predicated region
      $region49: #{tpu_custom_call.1} parent=5 // pred_check
        %p334 = pneg %p333
      $region50: #{tpu_custom_call.1} parent=5 // pred_check_branch
        %336 = sbr.rel (%p334) target = $region52
      $region51: #{tpu_custom_call.1} parent=5 // pred_region
        %s337 = ssub.s32 %s14, 2
        // Predicated region
        $region53: #{tpu_custom_call.1} parent=51 // pred_check
          %p338 = pneg %p127
        $region54: #{tpu_custom_call.1} parent=51 // pred_check_branch
          %340 = sbr.rel (%p338) target = $region56
        $region55: #{tpu_custom_call.1} parent=51 // pred_region
          %p341 = scmp.lt.s32.totalorder %s25, 1
          %s342 = scalar_select %p341, %s25, 1
          %p343 = scmp.lt.s32.totalorder %s26, 1
          %s344 = scalar_select %p343, %s26, 1
          %s345 = smul.addr %s342, 2
          %s346 = sadd.s32 %s344, %s345
          %s347 = smul.addr %s346, 4
          %s348 = scalar_lea.vmem %s3, %s347
        $region56: #{tpu_custom_call.1} parent=51 // pred_fallthru
          _
      $region52: #{tpu_custom_call.1} parent=5 // pred_fallthru
        _
    $region6: #{tpu_custom_call.1} parent=1 // loop_footer
      %s18 = sadd.s32 1, %s14
    $region7: #{tpu_custom_call.1} parent=1 // loop_footer_branch
      %13 = sbr.rel target = $region3
    $region8: #{tpu_custom_call.1} parent=1 // loop_exit
      _
    %349 = vsyncpa [#allocation3], 1
    %s350 = scalar_lea.sflag [#allocation3], 1
    %351 = vsyncpa %s350, 1
    %352 = vsyncpa [#allocation4], 1
    %s353 = scalar_lea.sflag [#allocation4], 1
    %354 = vsyncpa %s353, 1
    %355 = vsyncpa [#allocation5], 1
    %s356 = scalar_lea.sflag [#allocation5], 1
    %357 = vsyncpa %s356, 1

</llo_original>
